<compile_context>
chip_gen: v7x
topology: tpu7x:2x2x1
jax: 0.10.0
libtpu: 0.0.40
codegen_flags: <defaults>
</compile_context>

<pallas_src>
import functools

import jax
import jax.numpy as jnp
from jax.experimental import pallas as pl
from jax.experimental.pallas import tpu as pltpu


def _round_up(x, m):
    return (x + m - 1) // m * m


def _critic_kernel(state_ref, action_ref, slab_ref, b3_ref, o_ref, *,
                   S, A, H, off_a, off_w2, off_b1, off_b2, off_w3):
    # state: (TB, S), action: (TB, A), slab: (rows, H) packed params,
    # b3: (1,) scalar in SMEM, out: (TB, 1)
    s = state_ref[...]
    a = action_ref[...]

    # Static, 8-row-aligned slices of the packed parameter slab (pure views).
    w1s = slab_ref[0:S, :]                       # (S, H)
    w1a = slab_ref[off_a:off_a + A, :]           # (A, H)
    w2 = slab_ref[off_w2:off_w2 + H, :]          # (H, H)
    b1 = slab_ref[off_b1:off_b1 + 1, :]          # (1, H)
    b2 = slab_ref[off_b2:off_b2 + 1, :]          # (1, H)
    w3 = slab_ref[off_w3:off_w3 + 1, :]          # (1, H)  (w3 stored as a row)

    # Layer 1: fused concat -> two MXU passes, f32 accumulation.
    h1 = (jnp.dot(s, w1s, preferred_element_type=jnp.float32)
          + jnp.dot(a, w1a, preferred_element_type=jnp.float32)
          + b1)
    h1 = jnp.maximum(h1, 0.0)

    # Layer 2: MXU.
    h2 = jnp.dot(h1, w2, preferred_element_type=jnp.float32) + b2
    h2 = jnp.maximum(h2, 0.0)

    # Layer 3: (TB,H)@(H,1) as VPU multiply + XLU lane-reduce (skips a
    # nearly-all-padding MXU pass); b3 added as an SMEM scalar.
    q = jnp.sum(h2 * w3, axis=-1, keepdims=True) + b3_ref[0]
    o_ref[...] = q.astype(o_ref.dtype)


def init_critic_params(key, state_dim, action_dim, hidden_dim):
    """PyTorch-nn.Linear-style init (uniform +-1/sqrt(fan_in)).
    Weights stored as (in, out)."""
    def linear(key, fan_in, fan_out):
        kw, kb = jax.random.split(key)
        bound = 1.0 / jnp.sqrt(jnp.float32(fan_in))
        w = jax.random.uniform(kw, (fan_in, fan_out), jnp.float32, -bound, bound)
        b = jax.random.uniform(kb, (1, fan_out), jnp.float32, -bound, bound)
        return w, b

    k1, k2, k3 = jax.random.split(key, 3)
    w1, b1 = linear(k1, state_dim + action_dim, hidden_dim)
    w2, b2 = linear(k2, hidden_dim, hidden_dim)
    w3, b3 = linear(k3, hidden_dim, 1)
    return (w1, b1, w2, b2, w3, b3)


def pack_critic_params(params, state_dim, action_dim):
    """Pack all weights/biases into one (rows, H) f32 slab (single DMA) plus a
    (1,) SMEM scalar for b3.  Every section starts on an 8-row boundary so
    in-kernel slices are sublane-aligned."""
    w1, b1, w2, b2, w3, b3 = params
    S, A = state_dim, action_dim
    H = w2.shape[0]

    off_a = _round_up(S, 8)
    off_w2 = off_a + _round_up(A, 8)
    off_b1 = off_w2 + _round_up(H, 8)
    off_b2 = off_b1 + 8
    off_w3 = off_b2 + 8
    rows = off_w3 + 8

    slab = jnp.zeros((rows, H), jnp.float32)
    slab = slab.at[0:S, :].set(w1[:S, :].astype(jnp.float32))
    slab = slab.at[off_a:off_a + A, :].set(w1[S:S + A, :].astype(jnp.float32))
    slab = slab.at[off_w2:off_w2 + H, :].set(w2.astype(jnp.float32))
    slab = slab.at[off_b1, :].set(b1[0].astype(jnp.float32))
    slab = slab.at[off_b2, :].set(b2[0].astype(jnp.float32))
    slab = slab.at[off_w3, :].set(w3[:, 0].astype(jnp.float32))

    b3_scalar = jnp.reshape(b3, (1,)).astype(jnp.float32)
    meta = dict(S=S, A=A, H=H, off_a=off_a, off_w2=off_w2,
                off_b1=off_b1, off_b2=off_b2, off_w3=off_w3)
    return slab, b3_scalar, meta


def critic_forward(state, action, packed, *, block_batch=128):
    """Pallas Critic forward. state: (B, S), action: (B, A) -> (B, 1)."""
    slab, b3, meta = packed
    B, S = state.shape
    A = action.shape[1]
    H = meta["H"]

    TB = block_batch if B >= block_batch else B     # full-dim block if small
    grid = (pl.cdiv(B, TB),)

    kernel = functools.partial(_critic_kernel, **meta)

    flops_per_row = 2 * (S * H + A * H + H * H + H)
    cost = pl.CostEstimate(
        flops=B * flops_per_row,
        transcendentals=0,
        bytes_accessed=4 * (B * (S + A + 1) + slab.size + 1),
    )

    return pl.pallas_call(
        kernel,
        out_shape=jax.ShapeDtypeStruct((B, 1), jnp.float32),
        grid=grid,
        in_specs=[
            pl.BlockSpec((TB, S), lambda i: (i, 0)),          # state tile
            pl.BlockSpec((TB, A), lambda i: (i, 0)),          # action tile
            pl.BlockSpec(slab.shape, lambda i: (0, 0)),       # weights, VMEM-resident
            pl.BlockSpec(memory_space=pltpu.MemorySpace.SMEM),  # b3 scalar
        ],
        out_specs=pl.BlockSpec((TB, 1), lambda i: (i, 0)),
        compiler_params=pltpu.CompilerParams(
            dimension_semantics=("parallel",)),
        cost_estimate=cost,
    )(state.astype(jnp.float32), action.astype(jnp.float32), slab, b3)


def critic_ref(state, action, params):
    """Pure-JAX reference (mirrors the PyTorch module) for correctness."""
    w1, b1, w2, b2, w3, b3 = params
    x = jnp.concatenate([state, action], axis=1)
    h1 = jnp.maximum(x @ w1 + b1, 0.0)
    h2 = jnp.maximum(h1 @ w2 + b2, 0.0)
    return h2 @ w3 + b3


if __name__ == "__main__":
    # Small shapes; batch chosen > block_batch so the batch grid (including a
    # partial last tile) is exercised.
    batch, state_dim, action_dim, hidden_dim = 200, 12, 4, 32

    key = jax.random.PRNGKey(0)
    k_params, k_state, k_action = jax.random.split(key, 3)

    params = init_critic_params(k_params, state_dim, action_dim, hidden_dim)
    packed = pack_critic_params(params, state_dim, action_dim)

    state = jax.random.normal(k_state, (batch, state_dim), jnp.float32)
    action = jax.random.normal(k_action, (batch, action_dim), jnp.float32)

    q = critic_forward(state, action, packed)
    q = jax.block_until_ready(q)

    q_ref = critic_ref(state, action, params)
    assert q.shape == (batch, 1), q.shape
    assert jnp.allclose(q, q_ref, atol=1e-4, rtol=1e-4), "mismatch vs reference"

    print("KERNEL_OK")
</pallas_src>

<mosaic_0001>
module attributes {stable_mosaic.version = 11 : i64} {
  func.func @_critic_kernel(%arg0: i32, %arg1: memref<128x12xf32, #tpu.memory_space<vmem>>, %arg2: memref<128x4xf32, #tpu.memory_space<vmem>>, %arg3: memref<80x32xf32, #tpu.memory_space<vmem>>, %arg4: memref<1xf32, #tpu.memory_space<smem>>, %arg5: memref<128x1xf32, #tpu.memory_space<vmem>>) attributes {dimension_semantics = [#tpu.dimension_semantics<parallel>], iteration_bounds = array<i64: 2>, scalar_prefetch = 0 : i64, scratch_operands = 0 : i64, tpu.core_type = #tpu.core_type<tc>, window_params = [{transform_indices = @transform_0, window_bounds = array<i64: 128, 12>}, {transform_indices = @transform_1, window_bounds = array<i64: 128, 4>}, {pipeline_mode = #tpu.pipeline_mode<synchronous>, transform_indices = @transform_2, window_bounds = array<i64: 80, 32>}, {transform_indices = @transform_3, window_bounds = array<i64: 1>}, {transform_indices = @transform_4, window_bounds = array<i64: 128, 1>}]} {
    %c0 = arith.constant 0 : index
    %c0_0 = arith.constant 0 : index
    %0 = vector.load %arg1[%c0, %c0_0] : memref<128x12xf32, #tpu.memory_space<vmem>>, vector<128x12xf32>
    %c0_1 = arith.constant 0 : index
    %c0_2 = arith.constant 0 : index
    %1 = vector.load %arg2[%c0_1, %c0_2] : memref<128x4xf32, #tpu.memory_space<vmem>>, vector<128x4xf32>
    %c0_3 = arith.constant 0 : index
    %c0_4 = arith.constant 0 : index
    %2 = vector.load %arg3[%c0_3, %c0_4] : memref<80x32xf32, #tpu.memory_space<vmem>>, vector<12x32xf32>
    %c16 = arith.constant 16 : index
    %c0_5 = arith.constant 0 : index
    %3 = vector.load %arg3[%c16, %c0_5] : memref<80x32xf32, #tpu.memory_space<vmem>>, vector<4x32xf32>
    %c24 = arith.constant 24 : index
    %c0_6 = arith.constant 0 : index
    %4 = vector.load %arg3[%c24, %c0_6] : memref<80x32xf32, #tpu.memory_space<vmem>>, vector<32x32xf32>
    %c56 = arith.constant 56 : index
    %c0_7 = arith.constant 0 : index
    %5 = vector.load %arg3[%c56, %c0_7] : memref<80x32xf32, #tpu.memory_space<vmem>>, vector<1x32xf32>
    %c64 = arith.constant 64 : index
    %c0_8 = arith.constant 0 : index
    %6 = vector.load %arg3[%c64, %c0_8] : memref<80x32xf32, #tpu.memory_space<vmem>>, vector<1x32xf32>
    %c72 = arith.constant 72 : index
    %c0_9 = arith.constant 0 : index
    %7 = vector.load %arg3[%c72, %c0_9] : memref<80x32xf32, #tpu.memory_space<vmem>>, vector<1x32xf32>
    %cst = arith.constant dense<0.000000e+00> : vector<128x32xf32>
    %8 = tpu.matmul %0, %2, %cst {dimension_numbers = #tpu.dot_dimension_numbers<[1], [0], [0], [1], [0, 0, 1, 1], [], []>} : vector<128x12xf32>, vector<12x32xf32>, vector<128x32xf32> -> vector<128x32xf32>
    %cst_10 = arith.constant dense<0.000000e+00> : vector<128x32xf32>
    %9 = tpu.matmul %1, %3, %cst_10 {dimension_numbers = #tpu.dot_dimension_numbers<[1], [0], [0], [1], [0, 0, 1, 1], [], []>} : vector<128x4xf32>, vector<4x32xf32>, vector<128x32xf32> -> vector<128x32xf32>
    %10 = arith.addf %8, %9 : vector<128x32xf32>
    %11 = vector.broadcast %5 : vector<1x32xf32> to vector<128x32xf32>
    %12 = arith.addf %10, %11 : vector<128x32xf32>
    %cst_11 = arith.constant 0.000000e+00 : f32
    %13 = vector.broadcast %cst_11 : f32 to vector<128x32xf32>
    %14 = arith.maximumf %12, %13 : vector<128x32xf32>
    %cst_12 = arith.constant dense<0.000000e+00> : vector<128x32xf32>
    %15 = tpu.matmul %14, %4, %cst_12 {dimension_numbers = #tpu.dot_dimension_numbers<[1], [0], [0], [1], [0, 0, 1, 1], [], []>} : vector<128x32xf32>, vector<32x32xf32>, vector<128x32xf32> -> vector<128x32xf32>
    %16 = vector.broadcast %6 : vector<1x32xf32> to vector<128x32xf32>
    %17 = arith.addf %15, %16 : vector<128x32xf32>
    %cst_13 = arith.constant 0.000000e+00 : f32
    %18 = vector.broadcast %cst_13 : f32 to vector<128x32xf32>
    %19 = arith.maximumf %17, %18 : vector<128x32xf32>
    %20 = vector.broadcast %7 : vector<1x32xf32> to vector<128x32xf32>
    %21 = arith.mulf %19, %20 : vector<128x32xf32>
    %cst_14 = arith.constant dense<0.000000e+00> : vector<128xf32>
    %22 = vector.multi_reduction <add>, %21, %cst_14 [1] : vector<128x32xf32> to vector<128xf32>
    %23 = vector.shape_cast %22 : vector<128xf32> to vector<128x1xf32>
    %c0_15 = arith.constant 0 : index
    %24 = memref.load %arg4[%c0_15] : memref<1xf32, #tpu.memory_space<smem>>
    %25 = vector.broadcast %24 : f32 to vector<128x1xf32>
    %26 = arith.addf %23, %25 : vector<128x1xf32>
    %c0_16 = arith.constant 0 : index
    %c0_17 = arith.constant 0 : index
    %27 = vector.load %arg5[%c0_16, %c0_17] : memref<128x1xf32, #tpu.memory_space<vmem>>, vector<128x1xf32>
    tpu.vector_store %arg5[%c0_16, %c0_17], %26 {strides = array<i32>} : memref<128x1xf32, #tpu.memory_space<vmem>>, vector<128x1xf32>,
    return
  }
  func.func @transform_0(%arg0: i32) -> (i32, i32) {
    %c0_i32 = arith.constant 0 : i32
    %c0_i32_0 = arith.constant 0 : i32
    return %arg0, %c0_i32 : i32, i32
  }
  func.func @transform_1(%arg0: i32) -> (i32, i32) {
    %c0_i32 = arith.constant 0 : i32
    %c0_i32_0 = arith.constant 0 : i32
    return %arg0, %c0_i32 : i32, i32
  }
  func.func @transform_2(%arg0: i32) -> (i32, i32) {
    %c0_i32 = arith.constant 0 : i32
    %c0_i32_0 = arith.constant 0 : i32
    %c0_i32_1 = arith.constant 0 : i32
    return %c0_i32, %c0_i32_0 : i32, i32
  }
  func.func @transform_3(%arg0: i32) -> i32 {
    %c0_i32 = arith.constant 0 : i32
    %c0_i32_0 = arith.constant 0 : i32
    return %c0_i32 : i32
  }
  func.func @transform_4(%arg0: i32) -> (i32, i32) {
    %c0_i32 = arith.constant 0 : i32
    %c0_i32_0 = arith.constant 0 : i32
    return %arg0, %c0_i32 : i32, i32
  }
}

</mosaic_0001>

<llo_original>
// kernel: tpu_custom_call.1
$region0: #{tpu_custom_call.1}
  #allocation0 [shape = 'u32[]', space=smem, size = 0x4, offset = 0x4, fixed_abs, tag = 'smem constant byte address 0x4 - core index']
  #allocation1 [shape = 'u32[144,128]{1,0:T(1,128)}', space=vmem, size = 0x12000, scoped, tag = 'internal scratch']
  #allocation2 [shape = 'f32[1]{0:T(128)S(6)}', space=smem, size = 0x200, scoped, tag = 'scoped memory for tpu_custom_call.1']
  %s0 = inlined_call_operand.vmem [shape: f32[200,12], index: 0, kind: input, shape index: {}]
  %s1 = inlined_call_operand.vmem [shape: f32[200,4], index: 1, kind: input, shape index: {}]
  %s2 = inlined_call_operand.vmem [shape: f32[80,32], index: 2, kind: input, shape index: {}]
  %s3 = inlined_call_operand.<no memory space> [shape: f32[1], index: 3, kind: input, shape index: {}]
  %s4 = inlined_call_operand.vmem [shape: f32[200,1], index: 4, kind: output, shape index: {}]
  %s5 = sld [smem:[#allocation0]]
  $region97: #{tpu_custom_call.1} parent=0
    _
  %s7 = ssub.s32 1, %s5
  %s8 = scalar_select 0, %s7, %s5
  %9 = sst [smem:[#allocation2]] %s3
  $region1: #{tpu_custom_call.1} parent=0
    #allocation3 [shape = 'u8[131072]{0}', space=vmem, size = 0x20000, scoped, tag = 'output window, operand 0']
    loop: start=0, step=1, limit=4
    $region2: #{tpu_custom_call.1} parent=1 // loop_pre_header
      _
    $region3: #{tpu_custom_call.1} parent=1 // loop_header
      %s11 = sphi 0, %s15
      %p12 = scmp.ge.s32.totalorder %s11, 4
      %s21 = sphi 0, %s23
      %s24 = sphi 0, %s21
      %s25 = sphi 0, %s24
      %s41 = sphi 0, %s25
      %s47 = sphi 0, %s49
      %s50 = sphi 0, %s47
      %s51 = sphi 0, %s50
      %s67 = sphi 0, %s51
      %s71 = sphi 0, %s71
      %s73 = sphi 0, %s71
      %s74 = sphi 0, %s73
      %s88 = sphi 0, %s74
      %s92 = sphi 0, %s92
      %s94 = sphi 0, %s92
      %s95 = sphi 0, %s94
      %s109 = sphi 0, %s95
      %s115 = sphi 0, %s117
      %s118 = sphi 0, %s115
      %s119 = sphi 0, %s118
      %s135 = sphi 0, %s119
    $region4: #{tpu_custom_call.1} parent=1 // loop_header_branch
      %14 = sbr.rel (%p12) target = $region8
    $region5: #{tpu_custom_call.1} parent=1 // loop_body
      %s16 = ssub.s32 %s11, 1
      %s17 = ssub.s32 %s11, 2
      %s18 = sadd.s32 %s11, 1
      %s19 = ssub.s32 %s11, %s18
      %p20 = scmp.eq.s32.totalorder %s19, 0
      %s22 = sadd.s32 %s21, 1
      %s23 = scalar_select %p20, %s21, %s22
      %p26 = pneg %p20
      %p27 = scmp.eq.s32.totalorder %s11, 1
      %p28 = por %p26, %p27
      %p29 = scmp.ne.s32.totalorder %s21, %s24
      %p30 = scmp.eq.s32.totalorder %s11, 0
      %p31 = por %p29, %p30
      %p32 = scmp.ne.s32.totalorder %s21, %s24
      %p33 = scmp.eq.s32.totalorder %s16, 1
      %p34 = por %p32, %p33
      %p35 = scmp.ne.s32.totalorder %s24, %s25
      %p36 = scmp.eq.s32.totalorder %s16, 0
      %p37 = por %p35, %p36
      %p38 = scmp.ne.s32.totalorder %s24, %s25
      %p39 = scmp.eq.s32.totalorder %s17, 1
      %p40 = por %p38, %p39
      %p42 = scmp.ne.s32.totalorder %s25, %s41
      %p43 = scmp.eq.s32.totalorder %s17, 0
      %p44 = por %p42, %p43
      %s45 = ssub.s32 %s11, %s18
      %p46 = scmp.eq.s32.totalorder %s45, 0
      %s48 = sadd.s32 %s47, 1
      %s49 = scalar_select %p46, %s47, %s48
      %p52 = pneg %p46
      %p53 = scmp.eq.s32.totalorder %s11, 1
      %p54 = por %p52, %p53
      %p55 = scmp.ne.s32.totalorder %s47, %s50
      %p56 = scmp.eq.s32.totalorder %s11, 0
      %p57 = por %p55, %p56
      %p58 = scmp.ne.s32.totalorder %s47, %s50
      %p59 = scmp.eq.s32.totalorder %s16, 1
      %p60 = por %p58, %p59
      %p61 = scmp.ne.s32.totalorder %s50, %s51
      %p62 = scmp.eq.s32.totalorder %s16, 0
      %p63 = por %p61, %p62
      %p64 = scmp.ne.s32.totalorder %s50, %s51
      %p65 = scmp.eq.s32.totalorder %s17, 1
      %p66 = por %p64, %p65
      %p68 = scmp.ne.s32.totalorder %s51, %s67
      %p69 = scmp.eq.s32.totalorder %s17, 0
      %p70 = por %p68, %p69
      %s72 = sadd.s32 %s71, 1
      %p75 = scmp.eq.s32.totalorder %s11, 1
      %p76 = scmp.ne.s32.totalorder %s71, %s73
      %p77 = scmp.eq.s32.totalorder %s11, 0
      %p78 = por %p76, %p77
      %p79 = scmp.ne.s32.totalorder %s71, %s73
      %p80 = scmp.eq.s32.totalorder %s16, 1
      %p81 = por %p79, %p80
      %p82 = scmp.ne.s32.totalorder %s73, %s74
      %p83 = scmp.eq.s32.totalorder %s16, 0
      %p84 = por %p82, %p83
      %p85 = scmp.ne.s32.totalorder %s73, %s74
      %p86 = scmp.eq.s32.totalorder %s17, 1
      %p87 = por %p85, %p86
      %p89 = scmp.ne.s32.totalorder %s74, %s88
      %p90 = scmp.eq.s32.totalorder %s17, 0
      %p91 = por %p89, %p90
      %s93 = sadd.s32 %s92, 1
      %p96 = scmp.eq.s32.totalorder %s11, 1
      %p97 = scmp.ne.s32.totalorder %s92, %s94
      %p98 = scmp.eq.s32.totalorder %s11, 0
      %p99 = por %p97, %p98
      %p100 = scmp.ne.s32.totalorder %s92, %s94
      %p101 = scmp.eq.s32.totalorder %s16, 1
      %p102 = por %p100, %p101
      %p103 = scmp.ne.s32.totalorder %s94, %s95
      %p104 = scmp.eq.s32.totalorder %s16, 0
      %p105 = por %p103, %p104
      %p106 = scmp.ne.s32.totalorder %s94, %s95
      %p107 = scmp.eq.s32.totalorder %s17, 1
      %p108 = por %p106, %p107
      %p110 = scmp.ne.s32.totalorder %s95, %s109
      %p111 = scmp.eq.s32.totalorder %s17, 0
      %p112 = por %p110, %p111
      %s113 = ssub.s32 %s11, %s18
      %p114 = scmp.eq.s32.totalorder %s113, 0
      %s116 = sadd.s32 %s115, 1
      %s117 = scalar_select %p114, %s115, %s116
      %p120 = pneg %p114
      %p121 = scmp.eq.s32.totalorder %s11, 1
      %p122 = por %p120, %p121
      %p123 = scmp.ne.s32.totalorder %s115, %s118
      %p124 = scmp.eq.s32.totalorder %s11, 0
      %p125 = por %p123, %p124
      %p126 = scmp.ne.s32.totalorder %s115, %s118
      %p127 = scmp.eq.s32.totalorder %s16, 1
      %p128 = por %p126, %p127
      %p129 = scmp.ne.s32.totalorder %s118, %s119
      %p130 = scmp.eq.s32.totalorder %s16, 0
      %p131 = por %p129, %p130
      %p132 = scmp.ne.s32.totalorder %s118, %s119
      %p133 = scmp.eq.s32.totalorder %s17, 1
      %p134 = por %p132, %p133
      %p136 = scmp.ne.s32.totalorder %s119, %s135
      %p137 = scmp.eq.s32.totalorder %s17, 0
      %p138 = por %p136, %p137
      %p139 = scmp.le.s32.totalorder 1, %s11
      %p140 = scmp.lt.s32.totalorder %s11, 3
      %p141 = pnand %p139, %p140
      %p142 = pneg %p141
      // Predicated region
      $region9: #{tpu_custom_call.1} parent=5 // pred_check
        _
      $region10: #{tpu_custom_call.1} parent=5 // pred_check_branch
        %144 = sbr.rel (%p141) target = $region12
      $region11: #{tpu_custom_call.1} parent=5 // pred_region
        %s145 = ssub.s32 %s11, 1
        // Predicated region
        $region13: #{tpu_custom_call.1} parent=11 // pred_check
          %p146 = pneg %p84
        $region14: #{tpu_custom_call.1} parent=11 // pred_check_branch
          %148 = sbr.rel (%p146) target = $region16
        $region15: #{tpu_custom_call.1} parent=11 // pred_region
          _
        $region16: #{tpu_custom_call.1} parent=11 // pred_fallthru
          _
        // Predicated region
        $region17: #{tpu_custom_call.1} parent=11 // pred_check
          %p149 = pneg %p105
        $region18: #{tpu_custom_call.1} parent=11 // pred_check_branch
          %151 = sbr.rel (%p149) target = $region20
        $region19: #{tpu_custom_call.1} parent=11 // pred_region
          _
        $region20: #{tpu_custom_call.1} parent=11 // pred_fallthru
          _
      $region12: #{tpu_custom_call.1} parent=5 // pred_fallthru
        _
      %p152 = scmp.lt.s32.totalorder %s11, 2
      // Predicated region
      $region21: #{tpu_custom_call.1} parent=5 // pred_check
        %p153 = pneg %p152
      $region22: #{tpu_custom_call.1} parent=5 // pred_check_branch
        %155 = sbr.rel (%p153) target = $region24
      $region23: #{tpu_custom_call.1} parent=5 // pred_region
        // Predicated region
        $region25: #{tpu_custom_call.1} parent=23 // pred_check
          %p156 = pneg %p31
        $region26: #{tpu_custom_call.1} parent=23 // pred_check_branch
          %158 = sbr.rel (%p156) target = $region28
        $region27: #{tpu_custom_call.1} parent=23 // pred_region
          %s159 = smul.u32 16, %s11
          %s160 = ssub.s32 25, %s159
          %p161 = scmp.lt.s32.totalorder %s160, 16
          %s162 = scalar_select %p161, %s160, 16
          %s163 = smul.u32 128, %s162
          %p164 = scmp.lt.s32.totalorder %s159, 24
          %s165 = scalar_select %p164, %s159, 24
          %s166 = smul.addr %s165, 8
          %s167 = scalar_lea.vmem %s0, %s166
          %s168 = smul.u32 16, %s11
          %s169 = ssub.s32 25, %s168
          %p170 = scmp.lt.s32.totalorder %s169, 16
          %s171 = scalar_select %p170, %s169, 16
          %s172 = smul.u32 128, %s171
        $region28: #{tpu_custom_call.1} parent=23 // pred_fallthru
          _
        // Predicated region
        $region29: #{tpu_custom_call.1} parent=23 // pred_check
          %p173 = pneg %p57
        $region30: #{tpu_custom_call.1} parent=23 // pred_check_branch
          %175 = sbr.rel (%p173) target = $region32
        $region31: #{tpu_custom_call.1} parent=23 // pred_region
          %s176 = smul.u32 16, %s11
          %s177 = ssub.s32 25, %s176
          %p178 = scmp.lt.s32.totalorder %s177, 16
          %s179 = scalar_select %p178, %s177, 16
          %s180 = smul.u32 128, %s179
          %p181 = scmp.lt.s32.totalorder %s176, 24
          %s182 = scalar_select %p181, %s176, 24
          %s183 = smul.addr %s182, 8
          %s184 = scalar_lea.vmem %s1, %s183
          %s185 = smul.u32 16, %s11
          %s186 = ssub.s32 25, %s185
          %p187 = scmp.lt.s32.totalorder %s186, 16
          %s188 = scalar_select %p187, %s186, 16
          %s189 = smul.u32 128, %s188
        $region32: #{tpu_custom_call.1} parent=23 // pred_fallthru
          _
      $region24: #{tpu_custom_call.1} parent=5 // pred_fallthru
        _
      %p190 = scmp.le.s32.totalorder 1, %s11
      %p191 = scmp.lt.s32.totalorder %s11, 3
      %p192 = pnand %p190, %p191
      %p193 = pneg %p192
      // Predicated region
      $region33: #{tpu_custom_call.1} parent=5 // pred_check
        _
      $region34: #{tpu_custom_call.1} parent=5 // pred_check_branch
        %195 = sbr.rel (%p192) target = $region36
      $region35: #{tpu_custom_call.1} parent=5 // pred_region
        %s196 = ssub.s32 %s11, 1
        %s197 = smul.u32 16, %s16
        %s198 = ssub.s32 25, %s197
        %p199 = scmp.lt.s32.totalorder %s198, 16
        %s200 = scalar_select %p199, %s198, 16
        %s201 = smul.u32 128, %s200
        %p202 = scmp.lt.s32.totalorder %s197, 24
        %s203 = scalar_select %p202, %s197, 24
        %s204 = smul.addr %s203, 8
        %s205 = scalar_lea.vmem %s0, %s204
        %p206 = pneg %p37
        %p207 = pneg %p34
        %s208 = smul.u32 16, %s16
        %s209 = ssub.s32 25, %s208
        %p210 = scmp.lt.s32.totalorder %s209, 16
        %s211 = scalar_select %p210, %s209, 16
        %s212 = smul.u32 128, %s211
        %p213 = scmp.lt.s32.totalorder %s208, 24
        %s214 = scalar_select %p213, %s208, 24
        %s215 = smul.addr %s214, 8
        %s216 = scalar_lea.vmem %s1, %s215
        %p217 = pneg %p63
        %p218 = pneg %p60
        %p219 = pneg %p84
        %p220 = pneg %p81
        %p221 = pneg %p105
        %p222 = pneg %p102
        %p223 = pneg %p131
        %p224 = pneg %p128
        %s225 = sand.u32 %s118, 1
        %s226 = sand.u32 %s118, 1
        %s227 = smul.addr %s226, 128
        %s228 = scalar_lea.vmem [#allocation3], %s227
        %s229 = smul.u32 16, %s16
        %s230 = ssub.s32 25, %s229
        %p231 = scmp.lt.s32.totalorder %s230, 16
        %s232 = scalar_select %p231, %s230, 16
        %s233 = smul.u32 128, %s232
        %p234 = scmp.lt.s32.totalorder %s229, 24
        %s235 = scalar_select %p234, %s229, 24
        %s236 = smul.addr %s235, 8
        %s237 = scalar_lea.vmem %s0, %s236
        %s238 = smul.u32 16, %s16
        %s239 = ssub.s32 25, %s238
        %p240 = scmp.lt.s32.totalorder %s239, 16
        %s241 = scalar_select %p240, %s239, 16
        %s242 = smul.u32 128, %s241
        %s243 = smul.u32 16, %s16
        %s244 = ssub.s32 25, %s243
        %p245 = scmp.lt.s32.totalorder %s244, 16
        %s246 = scalar_select %p245, %s244, 16
        %s247 = smul.u32 128, %s246
        %p248 = scmp.lt.s32.totalorder %s243, 24
        %s249 = scalar_select %p248, %s243, 24
        %s250 = smul.addr %s249, 8
        %s251 = scalar_lea.vmem %s1, %s250
        %s252 = smul.u32 16, %s16
        %s253 = ssub.s32 25, %s252
        %p254 = scmp.lt.s32.totalorder %s253, 16
        %s255 = scalar_select %p254, %s253, 16
        %s256 = smul.u32 128, %s255
        %s257 = smul.u32 16, %s16
        %s258 = ssub.s32 25, %s257
        %p259 = scmp.lt.s32.totalorder %s258, 16
        %s260 = scalar_select %p259, %s258, 16
        %s261 = smul.u32 128, %s260
        %v262 = vld [vmem:[%s237] sm:$0xff]
        %v263 = vld [vmem:[%s237 + $0x8] sm:$0xff]
        %v264 = vld [vmem:[%s237 + $0x10] sm:$0xff]
        %v265 = vld [vmem:[%s237 + $0x18] sm:$0xff]
        %v266 = vld [vmem:[%s237 + $0x20] sm:$0xff]
        %v267 = vld [vmem:[%s237 + $0x28] sm:$0xff]
        %v268 = vld [vmem:[%s237 + $0x30] sm:$0xff]
        %v269 = vld [vmem:[%s237 + $0x38] sm:$0xff]
        %v270 = vld [vmem:[%s237 + $0x40] sm:$0xff]
        %v271 = vld [vmem:[%s237 + $0x48] sm:$0xff]
        %v272 = vld [vmem:[%s237 + $0x50] sm:$0xff]
        %v273 = vld [vmem:[%s237 + $0x58] sm:$0xff]
        %v274 = vld [vmem:[%s237 + $0x60] sm:$0xff]
        %v275 = vld [vmem:[%s237 + $0x68] sm:$0xff]
        %v276 = vld [vmem:[%s237 + $0x70] sm:$0xff]
        %v277 = vld [vmem:[%s237 + $0x78] sm:$0xff]
        %v278 = vld [vmem:[%s251] sm:$0xff]
        %v279 = vld [vmem:[%s251 + $0x8] sm:$0xff]
        %v280 = vld [vmem:[%s251 + $0x10] sm:$0xff]
        %v281 = vld [vmem:[%s251 + $0x18] sm:$0xff]
        %v282 = vld [vmem:[%s251 + $0x20] sm:$0xff]
        %v283 = vld [vmem:[%s251 + $0x28] sm:$0xff]
        %v284 = vld [vmem:[%s251 + $0x30] sm:$0xff]
        %v285 = vld [vmem:[%s251 + $0x38] sm:$0xff]
        %v286 = vld [vmem:[%s251 + $0x40] sm:$0xff]
        %v287 = vld [vmem:[%s251 + $0x48] sm:$0xff]
        %v288 = vld [vmem:[%s251 + $0x50] sm:$0xff]
        %v289 = vld [vmem:[%s251 + $0x58] sm:$0xff]
        %v290 = vld [vmem:[%s251 + $0x60] sm:$0xff]
        %v291 = vld [vmem:[%s251 + $0x68] sm:$0xff]
        %v292 = vld [vmem:[%s251 + $0x70] sm:$0xff]
        %v293 = vld [vmem:[%s251 + $0x78] sm:$0xff]
        %v294 = vld [vmem:[%s2] sm:$0xff]
        %v295 = vld [vmem:[%s2 + $0x8] sm:$0xf]
        %v296 = vld [vmem:[%s2 + $0x10] sm:$0xf]
        %v297 = vld [vmem:[%s2 + $0x18] sm:$0xff]
        %v298 = vld [vmem:[%s2 + $0x20] sm:$0xff]
        %v299 = vld [vmem:[%s2 + $0x28] sm:$0xff]
        %v300 = vld [vmem:[%s2 + $0x30] sm:$0xff]
        %v301 = vld [vmem:[%s2 + $0x38] sm:$0x1]
        %v302 = vld [vmem:[%s2 + $0x40] sm:$0x1]
        %v303 = vld [vmem:[%s2 + $0x48] sm:$0x1]
        %vm304 = vcmask 31744
        %v306 = vsel %vm304, %v278, 0
        %v309 = vsel %vm304, %v279, 0
        %v312 = vsel %vm304, %v280, 0
        %v315 = vsel %vm304, %v281, 0
        %v318 = vsel %vm304, %v282, 0
        %v321 = vsel %vm304, %v283, 0
        %v324 = vsel %vm304, %v284, 0
        %v327 = vsel %vm304, %v285, 0
        %v330 = vsel %vm304, %v286, 0
        %v333 = vsel %vm304, %v287, 0
        %v336 = vsel %vm304, %v288, 0
        %v339 = vsel %vm304, %v289, 0
        %v342 = vsel %vm304, %v290, 0
        %v345 = vsel %vm304, %v291, 0
        %v348 = vsel %vm304, %v292, 0
        %v351 = vsel %vm304, %v293, 0
        %vm353 = vcmask 1043456
        %v355 = vsel %vm353, %v296, 0
        %357 = vmatprep.subr.mxu0 0.0
        %358 = vmatpush1.msra.mxu0 %v355
        %359 = vmatprep.subr.mxu0 0.0
        %360 = vmatpush1.msra.mxu0 0.0
        %361 = vmatprep.subr.mxu0 0.0
        %362 = vmatpush1.msra.mxu0 0.0
        %363 = vmatprep.subr.mxu0 0.0
        %364 = vmatpush1.msra.mxu0 0.0
        %365 = vmatprep.subr.mxu0 0.0
        %366 = vmatpush1.msra.mxu0 0.0
        %367 = vmatprep.subr.mxu0 0.0
        %368 = vmatpush1.msra.mxu0 0.0
        %369 = vmatprep.subr.mxu0 0.0
        %370 = vmatpush1.msra.mxu0 0.0
        %371 = vmatprep.subr.mxu0 0.0
        %372 = vmatpush1.msra.mxu0 0.0
        %373 = vmatprep.subr.mxu0 0.0
        %374 = vmatpush1.msra.mxu0 0.0
        %375 = vmatprep.subr.mxu0 0.0
        %376 = vmatpush1.msra.mxu0 0.0
        %377 = vmatprep.subr.mxu0 0.0
        %378 = vmatpush1.msra.mxu0 0.0
        %379 = vmatprep.subr.mxu0 0.0
        %380 = vmatpush1.msra.mxu0 0.0
        %381 = vmatprep.subr.mxu0 0.0
        %382 = vmatpush1.msra.mxu0 0.0
        %383 = vmatprep.subr.mxu0 0.0
        %384 = vmatpush1.msra.mxu0 0.0
        %385 = vmatprep.subr.mxu0 0.0
        %386 = vmatpush1.msra.mxu0 0.0
        %387 = vmatprep.subr.mxu0 0.0
        %388 = vmatpush1.msra.mxu0 0.0
        %389 = vmatprep.subr.mxu0 0.0
        %390 = vmatpush1.msra.mxu0 0.0
        %391 = vmatprep.subr.mxu0 0.0
        %392 = vmatpush1.msra.mxu0 0.0
        %393 = vmatprep.subr.mxu0 0.0
        %394 = vmatpush1.msra.mxu0 0.0
        %395 = vmatprep.subr.mxu0 0.0
        %396 = vmatpush1.msra.mxu0 0.0
        %397 = vmatprep.subr.mxu0 0.0
        %398 = vmatpush1.msra.mxu0 0.0
        %399 = vmatprep.subr.mxu0 0.0
        %400 = vmatpush1.msra.mxu0 0.0
        %401 = vmatprep.subr.mxu0 0.0
        %402 = vmatpush1.msra.mxu0 0.0
        %403 = vmatprep.subr.mxu0 0.0
        %404 = vmatpush1.msra.mxu0 0.0
        %405 = vmatprep.subr.mxu0 0.0
        %406 = vmatpush1.msra.mxu0 0.0
        %407 = vmatprep.subr.mxu0 0.0
        %408 = vmatpush1.msra.mxu0 0.0
        %409 = vmatprep.subr.mxu0 0.0
        %410 = vmatpush1.msra.mxu0 0.0
        %411 = vmatprep.subr.mxu0 0.0
        %412 = vmatpush1.msra.mxu0 0.0
        %413 = vmatprep.subr.mxu0 0.0
        %414 = vmatpush1.msra.mxu0 0.0
        %415 = vmatprep.subr.mxu0 0.0
        %416 = vmatpush1.msra.mxu0 0.0
        %417 = vmatprep.subr.mxu0 0.0
        %418 = vmatpush1.msra.mxu0 0.0
        %419 = vmatprep.subr.mxu0 0.0
        %420 = vmatpush1.msra.mxu0 0.0
        %421 = vmatprep.mubr.f32.mxu0 0.0
        %422 = vmatmul.mubr.f32.gmra.mrb[0].mxu0 %v306
        %v423 = vpop.f32.mrb[0].mxu0
        %v424 = vadd.f32 0.0, %v423
        %v425 = vpop.f32.mrb[0].mxu0
        %426 = vmatprep.mubr.f32.mxu0 0.0
        %427 = vmatmul.mubr.f32.gmra.mrb[0].mxu0 %v309
        %v428 = vpop.f32.mrb[0].mxu0
        %v429 = vadd.f32 0.0, %v428
        %v430 = vpop.f32.mrb[0].mxu0
        %431 = vmatprep.mubr.f32.mxu0 0.0
        %432 = vmatmul.mubr.f32.gmra.mrb[0].mxu0 %v312
        %v433 = vpop.f32.mrb[0].mxu0
        %v434 = vadd.f32 0.0, %v433
        %v435 = vpop.f32.mrb[0].mxu0
        %436 = vmatprep.mubr.f32.mxu0 0.0
        %437 = vmatmul.mubr.f32.gmra.mrb[0].mxu0 %v315
        %v438 = vpop.f32.mrb[0].mxu0
        %v439 = vadd.f32 0.0, %v438
        %v440 = vpop.f32.mrb[0].mxu0
        %441 = vmatprep.mubr.f32.mxu0 0.0
        %442 = vmatmul.mubr.f32.gmra.mrb[0].mxu0 %v318
        %v443 = vpop.f32.mrb[0].mxu0
        %v444 = vadd.f32 0.0, %v443
        %v445 = vpop.f32.mrb[0].mxu0
        %446 = vmatprep.mubr.f32.mxu0 0.0
        %447 = vmatmul.mubr.f32.gmra.mrb[0].mxu0 %v321
        %v448 = vpop.f32.mrb[0].mxu0
        %v449 = vadd.f32 0.0, %v448
        %v450 = vpop.f32.mrb[0].mxu0
        %451 = vmatprep.mubr.f32.mxu0 0.0
        %452 = vmatmul.mubr.f32.gmra.mrb[0].mxu0 %v324
        %v453 = vpop.f32.mrb[0].mxu0
        %v454 = vadd.f32 0.0, %v453
        %v455 = vpop.f32.mrb[0].mxu0
        %456 = vmatprep.mubr.f32.mxu0 0.0
        %457 = vmatmul.mubr.f32.gmra.mrb[0].mxu0 %v327
        %v458 = vpop.f32.mrb[0].mxu0
        %v459 = vadd.f32 0.0, %v458
        %v460 = vpop.f32.mrb[0].mxu0
        %461 = vmatprep.mubr.f32.mxu0 0.0
        %462 = vmatmul.mubr.f32.gmra.mrb[0].mxu0 %v330
        %v463 = vpop.f32.mrb[0].mxu0
        %v464 = vadd.f32 0.0, %v463
        %v465 = vpop.f32.mrb[0].mxu0
        %466 = vmatprep.mubr.f32.mxu0 0.0
        %467 = vmatmul.mubr.f32.gmra.mrb[0].mxu0 %v333
        %v468 = vpop.f32.mrb[0].mxu0
        %v469 = vadd.f32 0.0, %v468
        %v470 = vpop.f32.mrb[0].mxu0
        %471 = vmatprep.mubr.f32.mxu0 0.0
        %472 = vmatmul.mubr.f32.gmra.mrb[0].mxu0 %v336
        %v473 = vpop.f32.mrb[0].mxu0
        %v474 = vadd.f32 0.0, %v473
        %v475 = vpop.f32.mrb[0].mxu0
        %476 = vmatprep.mubr.f32.mxu0 0.0
        %477 = vmatmul.mubr.f32.gmra.mrb[0].mxu0 %v339
        %v478 = vpop.f32.mrb[0].mxu0
        %v479 = vadd.f32 0.0, %v478
        %v480 = vpop.f32.mrb[0].mxu0
        %481 = vmatprep.mubr.f32.mxu0 0.0
        %482 = vmatmul.mubr.f32.gmra.mrb[0].mxu0 %v342
        %v483 = vpop.f32.mrb[0].mxu0
        %v484 = vadd.f32 0.0, %v483
        %v485 = vpop.f32.mrb[0].mxu0
        %486 = vmatprep.mubr.f32.mxu0 0.0
        %487 = vmatmul.mubr.f32.gmra.mrb[0].mxu0 %v345
        %v488 = vpop.f32.mrb[0].mxu0
        %v489 = vadd.f32 0.0, %v488
        %v490 = vpop.f32.mrb[0].mxu0
        %491 = vmatprep.mubr.f32.mxu0 0.0
        %492 = vmatmul.mubr.f32.gmra.mrb[0].mxu0 %v348
        %v493 = vpop.f32.mrb[0].mxu0
        %v494 = vadd.f32 0.0, %v493
        %v495 = vpop.f32.mrb[0].mxu0
        %496 = vmatprep.mubr.f32.mxu0 0.0
        %497 = vmatmul.mubr.f32.gmra.mrb[0].mxu0 %v351
        %v498 = vpop.f32.mrb[0].mxu0
        %v499 = vadd.f32 0.0, %v498
        %v500 = vpop.f32.mrb[0].mxu0
        %501 = vdwg.mxu0
        %vm502 = vcmask 97280
        %v504 = vsel %vm502, %v262, 0
        %v507 = vsel %vm502, %v263, 0
        %v510 = vsel %vm502, %v264, 0
        %v513 = vsel %vm502, %v265, 0
        %v516 = vsel %vm502, %v266, 0
        %v519 = vsel %vm502, %v267, 0
        %v522 = vsel %vm502, %v268, 0
        %v525 = vsel %vm502, %v269, 0
        %v528 = vsel %vm502, %v270, 0
        %v531 = vsel %vm502, %v271, 0
        %v534 = vsel %vm502, %v272, 0
        %v537 = vsel %vm502, %v273, 0
        %v540 = vsel %vm502, %v274, 0
        %v543 = vsel %vm502, %v275, 0
        %v546 = vsel %vm502, %v276, 0
        %v549 = vsel %vm502, %v277, 0
        %v552 = vsel %vm353, %v295, 0
        %554 = vmatprep.subr.mxu0 0.0
        %555 = vmatpush1.msra.mxu0 %v294
        %556 = vmatprep.subr.mxu0 0.0
        %557 = vmatpush1.msra.mxu0 %v552
        %558 = vmatprep.subr.mxu0 0.0
        %559 = vmatpush1.msra.mxu0 0.0
        %560 = vmatprep.subr.mxu0 0.0
        %561 = vmatpush1.msra.mxu0 0.0
        %562 = vmatprep.subr.mxu0 0.0
        %563 = vmatpush1.msra.mxu0 0.0
        %564 = vmatprep.subr.mxu0 0.0
        %565 = vmatpush1.msra.mxu0 0.0
        %566 = vmatprep.subr.mxu0 0.0
        %567 = vmatpush1.msra.mxu0 0.0
        %568 = vmatprep.subr.mxu0 0.0
        %569 = vmatpush1.msra.mxu0 0.0
        %570 = vmatprep.subr.mxu0 0.0
        %571 = vmatpush1.msra.mxu0 0.0
        %572 = vmatprep.subr.mxu0 0.0
        %573 = vmatpush1.msra.mxu0 0.0
        %574 = vmatprep.subr.mxu0 0.0
        %575 = vmatpush1.msra.mxu0 0.0
        %576 = vmatprep.subr.mxu0 0.0
        %577 = vmatpush1.msra.mxu0 0.0
        %578 = vmatprep.subr.mxu0 0.0
        %579 = vmatpush1.msra.mxu0 0.0
        %580 = vmatprep.subr.mxu0 0.0
        %581 = vmatpush1.msra.mxu0 0.0
        %582 = vmatprep.subr.mxu0 0.0
        %583 = vmatpush1.msra.mxu0 0.0
        %584 = vmatprep.subr.mxu0 0.0
        %585 = vmatpush1.msra.mxu0 0.0
        %586 = vmatprep.subr.mxu0 0.0
        %587 = vmatpush1.msra.mxu0 0.0
        %588 = vmatprep.subr.mxu0 0.0
        %589 = vmatpush1.msra.mxu0 0.0
        %590 = vmatprep.subr.mxu0 0.0
        %591 = vmatpush1.msra.mxu0 0.0
        %592 = vmatprep.subr.mxu0 0.0
        %593 = vmatpush1.msra.mxu0 0.0
        %594 = vmatprep.subr.mxu0 0.0
        %595 = vmatpush1.msra.mxu0 0.0
        %596 = vmatprep.subr.mxu0 0.0
        %597 = vmatpush1.msra.mxu0 0.0
        %598 = vmatprep.subr.mxu0 0.0
        %599 = vmatpush1.msra.mxu0 0.0
        %600 = vmatprep.subr.mxu0 0.0
        %601 = vmatpush1.msra.mxu0 0.0
        %602 = vmatprep.subr.mxu0 0.0
        %603 = vmatpush1.msra.mxu0 0.0
        %604 = vmatprep.subr.mxu0 0.0
        %605 = vmatpush1.msra.mxu0 0.0
        %606 = vmatprep.subr.mxu0 0.0
        %607 = vmatpush1.msra.mxu0 0.0
        %608 = vmatprep.subr.mxu0 0.0
        %609 = vmatpush1.msra.mxu0 0.0
        %610 = vmatprep.subr.mxu0 0.0
        %611 = vmatpush1.msra.mxu0 0.0
        %612 = vmatprep.subr.mxu0 0.0
        %613 = vmatpush1.msra.mxu0 0.0
        %614 = vmatprep.subr.mxu0 0.0
        %615 = vmatpush1.msra.mxu0 0.0
        %616 = vmatprep.subr.mxu0 0.0
        %617 = vmatpush1.msra.mxu0 0.0
        %618 = vmatprep.mubr.f32.mxu0 0.0
        %619 = vmatmul.mubr.f32.gmra.mrb[0].mxu0 %v504
        %v620 = vpop.f32.mrb[0].mxu0
        %v621 = vadd.f32 %v424, %v620
        %v622 = vpop.f32.mrb[0].mxu0
        %623 = vmatprep.mubr.f32.mxu0 0.0
        %624 = vmatmul.mubr.f32.gmra.mrb[0].mxu0 %v507
        %v625 = vpop.f32.mrb[0].mxu0
        %v626 = vadd.f32 %v429, %v625
        %v627 = vpop.f32.mrb[0].mxu0
        %628 = vmatprep.mubr.f32.mxu0 0.0
        %629 = vmatmul.mubr.f32.gmra.mrb[0].mxu0 %v510
        %v630 = vpop.f32.mrb[0].mxu0
        %v631 = vadd.f32 %v434, %v630
        %v632 = vpop.f32.mrb[0].mxu0
        %633 = vmatprep.mubr.f32.mxu0 0.0
        %634 = vmatmul.mubr.f32.gmra.mrb[0].mxu0 %v513
        %v635 = vpop.f32.mrb[0].mxu0
        %v636 = vadd.f32 %v439, %v635
        %v637 = vpop.f32.mrb[0].mxu0
        %638 = vmatprep.mubr.f32.mxu0 0.0
        %639 = vmatmul.mubr.f32.gmra.mrb[0].mxu0 %v516
        %v640 = vpop.f32.mrb[0].mxu0
        %v641 = vadd.f32 %v444, %v640
        %v642 = vpop.f32.mrb[0].mxu0
        %643 = vmatprep.mubr.f32.mxu0 0.0
        %644 = vmatmul.mubr.f32.gmra.mrb[0].mxu0 %v519
        %v645 = vpop.f32.mrb[0].mxu0
        %v646 = vadd.f32 %v449, %v645
        %v647 = vpop.f32.mrb[0].mxu0
        %648 = vmatprep.mubr.f32.mxu0 0.0
        %649 = vmatmul.mubr.f32.gmra.mrb[0].mxu0 %v522
        %v650 = vpop.f32.mrb[0].mxu0
        %v651 = vadd.f32 %v454, %v650
        %v652 = vpop.f32.mrb[0].mxu0
        %653 = vmatprep.mubr.f32.mxu0 0.0
        %654 = vmatmul.mubr.f32.gmra.mrb[0].mxu0 %v525
        %v655 = vpop.f32.mrb[0].mxu0
        %v656 = vadd.f32 %v459, %v655
        %v657 = vpop.f32.mrb[0].mxu0
        %658 = vmatprep.mubr.f32.mxu0 0.0
        %659 = vmatmul.mubr.f32.gmra.mrb[0].mxu0 %v528
        %v660 = vpop.f32.mrb[0].mxu0
        %v661 = vadd.f32 %v464, %v660
        %v662 = vpop.f32.mrb[0].mxu0
        %663 = vmatprep.mubr.f32.mxu0 0.0
        %664 = vmatmul.mubr.f32.gmra.mrb[0].mxu0 %v531
        %v665 = vpop.f32.mrb[0].mxu0
        %v666 = vadd.f32 %v469, %v665
        %v667 = vpop.f32.mrb[0].mxu0
        %668 = vmatprep.mubr.f32.mxu0 0.0
        %669 = vmatmul.mubr.f32.gmra.mrb[0].mxu0 %v534
        %v670 = vpop.f32.mrb[0].mxu0
        %v671 = vadd.f32 %v474, %v670
        %v672 = vpop.f32.mrb[0].mxu0
        %673 = vmatprep.mubr.f32.mxu0 0.0
        %674 = vmatmul.mubr.f32.gmra.mrb[0].mxu0 %v537
        %v675 = vpop.f32.mrb[0].mxu0
        %v676 = vadd.f32 %v479, %v675
        %v677 = vpop.f32.mrb[0].mxu0
        %678 = vmatprep.mubr.f32.mxu0 0.0
        %679 = vmatmul.mubr.f32.gmra.mrb[0].mxu0 %v540
        %v680 = vpop.f32.mrb[0].mxu0
        %v681 = vadd.f32 %v484, %v680
        %v682 = vpop.f32.mrb[0].mxu0
        %683 = vmatprep.mubr.f32.mxu0 0.0
        %684 = vmatmul.mubr.f32.gmra.mrb[0].mxu0 %v543
        %v685 = vpop.f32.mrb[0].mxu0
        %v686 = vadd.f32 %v489, %v685
        %v687 = vpop.f32.mrb[0].mxu0
        %688 = vmatprep.mubr.f32.mxu0 0.0
        %689 = vmatmul.mubr.f32.gmra.mrb[0].mxu0 %v546
        %v690 = vpop.f32.mrb[0].mxu0
        %v691 = vadd.f32 %v494, %v690
        %v692 = vpop.f32.mrb[0].mxu0
        %693 = vmatprep.mubr.f32.mxu0 0.0
        %694 = vmatmul.mubr.f32.gmra.mrb[0].mxu0 %v549
        %v695 = vpop.f32.mrb[0].mxu0
        %v696 = vadd.f32 %v499, %v695
        %v697 = vpop.f32.mrb[0].mxu0
        %698 = vdwg.mxu0
        %v699 = vlaneseq
        %v700 = vshrl.u32 %v699, 7
        %v701 = vsub.s32 0, %v700
        %v702 = vrot.slane %v301, %v701
        %v703 = vadd.f32 %v621, %v702
        %v704 = vadd.f32 %v626, %v702
        %v705 = vadd.f32 %v631, %v702
        %v706 = vadd.f32 %v636, %v702
        %v707 = vadd.f32 %v641, %v702
        %v708 = vadd.f32 %v646, %v702
        %v709 = vadd.f32 %v651, %v702
        %v710 = vadd.f32 %v656, %v702
        %v711 = vadd.f32 %v661, %v702
        %v712 = vadd.f32 %v666, %v702
        %v713 = vadd.f32 %v671, %v702
        %v714 = vadd.f32 %v676, %v702
        %v715 = vadd.f32 %v681, %v702
        %v716 = vadd.f32 %v686, %v702
        %v717 = vadd.f32 %v691, %v702
        %v718 = vadd.f32 %v696, %v702
        %v719 = vmax.f32 %v703, 0.0
        %v720 = vmax.f32 %v704, 0.0
        %v721 = vmax.f32 %v705, 0.0
        %v722 = vmax.f32 %v706, 0.0
        %v723 = vmax.f32 %v707, 0.0
        %v724 = vmax.f32 %v708, 0.0
        %v725 = vmax.f32 %v709, 0.0
        %v726 = vmax.f32 %v710, 0.0
        %v727 = vmax.f32 %v711, 0.0
        %v728 = vmax.f32 %v712, 0.0
        %v729 = vmax.f32 %v713, 0.0
        %v730 = vmax.f32 %v714, 0.0
        %v731 = vmax.f32 %v715, 0.0
        %v732 = vmax.f32 %v716, 0.0
        %v733 = vmax.f32 %v717, 0.0
        %v734 = vmax.f32 %v718, 0.0
        %v735 = vlaneseq
        %v736 = vshrl.u32 %v735, 7
        %v737 = vsub.s32 0, %v736
        %v738 = vrot.slane %v302, %v737
        %vm739 = vcmask 261120
        %v741 = vsel %vm739, %v719, 0
        %v744 = vsel %vm739, %v720, 0
        %v747 = vsel %vm739, %v721, 0
        %v750 = vsel %vm739, %v722, 0
        %v753 = vsel %vm739, %v723, 0
        %v756 = vsel %vm739, %v724, 0
        %v759 = vsel %vm739, %v725, 0
        %v762 = vsel %vm739, %v726, 0
        %v765 = vsel %vm739, %v727, 0
        %v768 = vsel %vm739, %v728, 0
        %v771 = vsel %vm739, %v729, 0
        %v774 = vsel %vm739, %v730, 0
        %v777 = vsel %vm739, %v731, 0
        %v780 = vsel %vm739, %v732, 0
        %v783 = vsel %vm739, %v733, 0
        %v786 = vsel %vm739, %v734, 0
        %788 = vmatprep.subr.mxu0 0.0
        %789 = vmatpush1.msra.mxu0 %v297
        %790 = vmatprep.subr.mxu0 0.0
        %791 = vmatpush1.msra.mxu0 %v298
        %792 = vmatprep.subr.mxu0 0.0
        %793 = vmatpush1.msra.mxu0 %v299
        %794 = vmatprep.subr.mxu0 0.0
        %795 = vmatpush1.msra.mxu0 %v300
        %796 = vmatprep.subr.mxu0 0.0
        %797 = vmatpush1.msra.mxu0 0.0
        %798 = vmatprep.subr.mxu0 0.0
        %799 = vmatpush1.msra.mxu0 0.0
        %800 = vmatprep.subr.mxu0 0.0
        %801 = vmatpush1.msra.mxu0 0.0
        %802 = vmatprep.subr.mxu0 0.0
        %803 = vmatpush1.msra.mxu0 0.0
        %804 = vmatprep.subr.mxu0 0.0
        %805 = vmatpush1.msra.mxu0 0.0
        %806 = vmatprep.subr.mxu0 0.0
        %807 = vmatpush1.msra.mxu0 0.0
        %808 = vmatprep.subr.mxu0 0.0
        %809 = vmatpush1.msra.mxu0 0.0
        %810 = vmatprep.subr.mxu0 0.0
        %811 = vmatpush1.msra.mxu0 0.0
        %812 = vmatprep.subr.mxu0 0.0
        %813 = vmatpush1.msra.mxu0 0.0
        %814 = vmatprep.subr.mxu0 0.0
        %815 = vmatpush1.msra.mxu0 0.0
        %816 = vmatprep.subr.mxu0 0.0
        %817 = vmatpush1.msra.mxu0 0.0
        %818 = vmatprep.subr.mxu0 0.0
        %819 = vmatpush1.msra.mxu0 0.0
        %820 = vmatprep.subr.mxu0 0.0
        %821 = vmatpush1.msra.mxu0 0.0
        %822 = vmatprep.subr.mxu0 0.0
        %823 = vmatpush1.msra.mxu0 0.0
        %824 = vmatprep.subr.mxu0 0.0
        %825 = vmatpush1.msra.mxu0 0.0
        %826 = vmatprep.subr.mxu0 0.0
        %827 = vmatpush1.msra.mxu0 0.0
        %828 = vmatprep.subr.mxu0 0.0
        %829 = vmatpush1.msra.mxu0 0.0
        %830 = vmatprep.subr.mxu0 0.0
        %831 = vmatpush1.msra.mxu0 0.0
        %832 = vmatprep.subr.mxu0 0.0
        %833 = vmatpush1.msra.mxu0 0.0
        %834 = vmatprep.subr.mxu0 0.0
        %835 = vmatpush1.msra.mxu0 0.0
        %836 = vmatprep.subr.mxu0 0.0
        %837 = vmatpush1.msra.mxu0 0.0
        %838 = vmatprep.subr.mxu0 0.0
        %839 = vmatpush1.msra.mxu0 0.0
        %840 = vmatprep.subr.mxu0 0.0
        %841 = vmatpush1.msra.mxu0 0.0
        %842 = vmatprep.subr.mxu0 0.0
        %843 = vmatpush1.msra.mxu0 0.0
        %844 = vmatprep.subr.mxu0 0.0
        %845 = vmatpush1.msra.mxu0 0.0
        %846 = vmatprep.subr.mxu0 0.0
        %847 = vmatpush1.msra.mxu0 0.0
        %848 = vmatprep.subr.mxu0 0.0
        %849 = vmatpush1.msra.mxu0 0.0
        %850 = vmatprep.subr.mxu0 0.0
        %851 = vmatpush1.msra.mxu0 0.0
        %852 = vmatprep.mubr.f32.mxu0 0.0
        %853 = vmatmul.mubr.f32.gmra.mrb[0].mxu0 %v741
        %v854 = vpop.f32.mrb[0].mxu0
        %v855 = vadd.f32 %v738, %v854
        %v856 = vpop.f32.mrb[0].mxu0
        %857 = vmatprep.mubr.f32.mxu0 0.0
        %858 = vmatmul.mubr.f32.gmra.mrb[0].mxu0 %v744
        %v859 = vpop.f32.mrb[0].mxu0
        %v860 = vadd.f32 %v738, %v859
        %v861 = vpop.f32.mrb[0].mxu0
        %862 = vmatprep.mubr.f32.mxu0 0.0
        %863 = vmatmul.mubr.f32.gmra.mrb[0].mxu0 %v747
        %v864 = vpop.f32.mrb[0].mxu0
        %v865 = vadd.f32 %v738, %v864
        %v866 = vpop.f32.mrb[0].mxu0
        %867 = vmatprep.mubr.f32.mxu0 0.0
        %868 = vmatmul.mubr.f32.gmra.mrb[0].mxu0 %v750
        %v869 = vpop.f32.mrb[0].mxu0
        %v870 = vadd.f32 %v738, %v869
        %v871 = vpop.f32.mrb[0].mxu0
        %872 = vmatprep.mubr.f32.mxu0 0.0
        %873 = vmatmul.mubr.f32.gmra.mrb[0].mxu0 %v753
        %v874 = vpop.f32.mrb[0].mxu0
        %v875 = vadd.f32 %v738, %v874
        %v876 = vpop.f32.mrb[0].mxu0
        %877 = vmatprep.mubr.f32.mxu0 0.0
        %878 = vmatmul.mubr.f32.gmra.mrb[0].mxu0 %v756
        %v879 = vpop.f32.mrb[0].mxu0
        %v880 = vadd.f32 %v738, %v879
        %v881 = vpop.f32.mrb[0].mxu0
        %882 = vmatprep.mubr.f32.mxu0 0.0
        %883 = vmatmul.mubr.f32.gmra.mrb[0].mxu0 %v759
        %v884 = vpop.f32.mrb[0].mxu0
        %v885 = vadd.f32 %v738, %v884
        %v886 = vpop.f32.mrb[0].mxu0
        %887 = vmatprep.mubr.f32.mxu0 0.0
        %888 = vmatmul.mubr.f32.gmra.mrb[0].mxu0 %v762
        %v889 = vpop.f32.mrb[0].mxu0
        %v890 = vadd.f32 %v738, %v889
        %v891 = vpop.f32.mrb[0].mxu0
        %892 = vmatprep.mubr.f32.mxu0 0.0
        %893 = vmatmul.mubr.f32.gmra.mrb[0].mxu0 %v765
        %v894 = vpop.f32.mrb[0].mxu0
        %v895 = vadd.f32 %v738, %v894
        %v896 = vpop.f32.mrb[0].mxu0
        %897 = vmatprep.mubr.f32.mxu0 0.0
        %898 = vmatmul.mubr.f32.gmra.mrb[0].mxu0 %v768
        %v899 = vpop.f32.mrb[0].mxu0
        %v900 = vadd.f32 %v738, %v899
        %v901 = vpop.f32.mrb[0].mxu0
        %902 = vmatprep.mubr.f32.mxu0 0.0
        %903 = vmatmul.mubr.f32.gmra.mrb[0].mxu0 %v771
        %v904 = vpop.f32.mrb[0].mxu0
        %v905 = vadd.f32 %v738, %v904
        %v906 = vpop.f32.mrb[0].mxu0
        %907 = vmatprep.mubr.f32.mxu0 0.0
        %908 = vmatmul.mubr.f32.gmra.mrb[0].mxu0 %v774
        %v909 = vpop.f32.mrb[0].mxu0
        %v910 = vadd.f32 %v738, %v909
        %v911 = vpop.f32.mrb[0].mxu0
        %912 = vmatprep.mubr.f32.mxu0 0.0
        %913 = vmatmul.mubr.f32.gmra.mrb[0].mxu0 %v777
        %v914 = vpop.f32.mrb[0].mxu0
        %v915 = vadd.f32 %v738, %v914
        %v916 = vpop.f32.mrb[0].mxu0
        %917 = vmatprep.mubr.f32.mxu0 0.0
        %918 = vmatmul.mubr.f32.gmra.mrb[0].mxu0 %v780
        %v919 = vpop.f32.mrb[0].mxu0
        %v920 = vadd.f32 %v738, %v919
        %v921 = vpop.f32.mrb[0].mxu0
        %922 = vmatprep.mubr.f32.mxu0 0.0
        %923 = vmatmul.mubr.f32.gmra.mrb[0].mxu0 %v783
        %v924 = vpop.f32.mrb[0].mxu0
        %v925 = vadd.f32 %v738, %v924
        %v926 = vpop.f32.mrb[0].mxu0
        %927 = vmatprep.mubr.f32.mxu0 0.0
        %928 = vmatmul.mubr.f32.gmra.mrb[0].mxu0 %v786
        %v929 = vpop.f32.mrb[0].mxu0
        %v930 = vadd.f32 %v738, %v929
        %v931 = vpop.f32.mrb[0].mxu0
        %932 = vdwg.mxu0
        %v933 = vmax.f32 %v855, 0.0
        %v934 = vmax.f32 %v860, 0.0
        %v935 = vmax.f32 %v865, 0.0
        %v936 = vmax.f32 %v870, 0.0
        %v937 = vmax.f32 %v875, 0.0
        %v938 = vmax.f32 %v880, 0.0
        %v939 = vmax.f32 %v885, 0.0
        %v940 = vmax.f32 %v890, 0.0
        %v941 = vmax.f32 %v895, 0.0
        %v942 = vmax.f32 %v900, 0.0
        %v943 = vmax.f32 %v905, 0.0
        %v944 = vmax.f32 %v910, 0.0
        %v945 = vmax.f32 %v915, 0.0
        %v946 = vmax.f32 %v920, 0.0
        %v947 = vmax.f32 %v925, 0.0
        %v948 = vmax.f32 %v930, 0.0
        %v949 = vlaneseq
        %v950 = vshrl.u32 %v949, 7
        %v951 = vsub.s32 0, %v950
        %v952 = vrot.slane %v303, %v951
        %v953 = vmul.f32 %v933, %v952
        %v954 = vmul.f32 %v934, %v952
        %v955 = vmul.f32 %v935, %v952
        %v956 = vmul.f32 %v936, %v952
        %v957 = vmul.f32 %v937, %v952
        %v958 = vmul.f32 %v938, %v952
        %v959 = vmul.f32 %v939, %v952
        %v960 = vmul.f32 %v940, %v952
        %v961 = vmul.f32 %v941, %v952
        %v962 = vmul.f32 %v942, %v952
        %v963 = vmul.f32 %v943, %v952
        %v964 = vmul.f32 %v944, %v952
        %v965 = vmul.f32 %v945, %v952
        %v966 = vmul.f32 %v946, %v952
        %v967 = vmul.f32 %v947, %v952
        %v968 = vmul.f32 %v948, %v952
        %v969 = vsel %vm739, %v953, 0.0
        %970 = vadd.xlane.f32.xlu0 %v969
        %v971 = vpop.xlane.xlu0 %970
        %v972 = vsel %vm739, %v954, 0.0
        %973 = vadd.xlane.f32.xlu0 %v972
        %v974 = vpop.xlane.xlu0 %973
        %v975 = vsel %vm739, %v955, 0.0
        %976 = vadd.xlane.f32.xlu0 %v975
        %v977 = vpop.xlane.xlu0 %976
        %v978 = vsel %vm739, %v956, 0.0
        %979 = vadd.xlane.f32.xlu0 %v978
        %v980 = vpop.xlane.xlu0 %979
        %v981 = vsel %vm739, %v957, 0.0
        %982 = vadd.xlane.f32.xlu0 %v981
        %v983 = vpop.xlane.xlu0 %982
        %v984 = vsel %vm739, %v958, 0.0
        %985 = vadd.xlane.f32.xlu0 %v984
        %v986 = vpop.xlane.xlu0 %985
        %v987 = vsel %vm739, %v959, 0.0
        %988 = vadd.xlane.f32.xlu0 %v987
        %v989 = vpop.xlane.xlu0 %988
        %v990 = vsel %vm739, %v960, 0.0
        %991 = vadd.xlane.f32.xlu0 %v990
        %v992 = vpop.xlane.xlu0 %991
        %v993 = vsel %vm739, %v961, 0.0
        %994 = vadd.xlane.f32.xlu0 %v993
        %v995 = vpop.xlane.xlu0 %994
        %v996 = vsel %vm739, %v962, 0.0
        %997 = vadd.xlane.f32.xlu0 %v996
        %v998 = vpop.xlane.xlu0 %997
        %v999 = vsel %vm739, %v963, 0.0
        %1000 = vadd.xlane.f32.xlu0 %v999
        %v1001 = vpop.xlane.xlu0 %1000
        %v1002 = vsel %vm739, %v964, 0.0
        %1003 = vadd.xlane.f32.xlu0 %v1002
        %v1004 = vpop.xlane.xlu0 %1003
        %v1005 = vsel %vm739, %v965, 0.0
        %1006 = vadd.xlane.f32.xlu0 %v1005
        %v1007 = vpop.xlane.xlu0 %1006
        %v1008 = vsel %vm739, %v966, 0.0
        %1009 = vadd.xlane.f32.xlu0 %v1008
        %v1010 = vpop.xlane.xlu0 %1009
        %v1011 = vsel %vm739, %v967, 0.0
        %1012 = vadd.xlane.f32.xlu0 %v1011
        %v1013 = vpop.xlane.xlu0 %1012
        %v1014 = vsel %vm739, %v968, 0.0
        %1015 = vadd.xlane.f32.xlu0 %v1014
        %v1016 = vpop.xlane.xlu0 %1015
        %s1017 = sld [smem:[#allocation2]]
        %v1018 = vstv %s1017
        %v1019 = vadd.f32 %v971, %v1018
        %v1020 = vadd.f32 %v974, %v1018
        %v1021 = vadd.f32 %v977, %v1018
        %v1022 = vadd.f32 %v980, %v1018
        %v1023 = vadd.f32 %v983, %v1018
        %v1024 = vadd.f32 %v986, %v1018
        %v1025 = vadd.f32 %v989, %v1018
        %v1026 = vadd.f32 %v992, %v1018
        %v1027 = vadd.f32 %v995, %v1018
        %v1028 = vadd.f32 %v998, %v1018
        %v1029 = vadd.f32 %v1001, %v1018
        %v1030 = vadd.f32 %v1004, %v1018
        %v1031 = vadd.f32 %v1007, %v1018
        %v1032 = vadd.f32 %v1010, %v1018
        %v1033 = vadd.f32 %v1013, %v1018
        %v1034 = vadd.f32 %v1016, %v1018
        %vm1035 = vcmask 7168
        %1036 = vst.msk [vmem:[%s228] sm:$0xff] %vm1035, %v1019
        %1037 = vst.msk [vmem:[%s228 + $0x8] sm:$0xff] %vm1035, %v1020
        %1038 = vst.msk [vmem:[%s228 + $0x10] sm:$0xff] %vm1035, %v1021
        %1039 = vst.msk [vmem:[%s228 + $0x18] sm:$0xff] %vm1035, %v1022
        %1040 = vst.msk [vmem:[%s228 + $0x20] sm:$0xff] %vm1035, %v1023
        %1041 = vst.msk [vmem:[%s228 + $0x28] sm:$0xff] %vm1035, %v1024
        %1042 = vst.msk [vmem:[%s228 + $0x30] sm:$0xff] %vm1035, %v1025
        %1043 = vst.msk [vmem:[%s228 + $0x38] sm:$0xff] %vm1035, %v1026
        %1044 = vst.msk [vmem:[%s228 + $0x40] sm:$0xff] %vm1035, %v1027
        %1045 = vst.msk [vmem:[%s228 + $0x48] sm:$0xff] %vm1035, %v1028
        %1046 = vst.msk [vmem:[%s228 + $0x50] sm:$0xff] %vm1035, %v1029
        %1047 = vst.msk [vmem:[%s228 + $0x58] sm:$0xff] %vm1035, %v1030
        %1048 = vst.msk [vmem:[%s228 + $0x60] sm:$0xff] %vm1035, %v1031
        %1049 = vst.msk [vmem:[%s228 + $0x68] sm:$0xff] %vm1035, %v1032
        %1050 = vst.msk [vmem:[%s228 + $0x70] sm:$0xff] %vm1035, %v1033
        %1051 = vst.msk [vmem:[%s228 + $0x78] sm:$0xff] %vm1035, %v1034
        %s1052 = sand.u32 %s118, 1
        %s1053 = sand.u32 %s118, 1
        %s1054 = smul.addr %s1053, 128
        %s1055 = scalar_lea.vmem [#allocation3], %s1054
        // Predicated region
        $region37: #{tpu_custom_call.1} parent=35 // pred_check
          %p1056 = pneg %p128
        $region38: #{tpu_custom_call.1} parent=35 // pred_check_branch
          %1058 = sbr.rel (%p1056) target = $region40
        $region39: #{tpu_custom_call.1} parent=35 // pred_region
          %s1059 = smul.u32 16, %s16
          %s1060 = ssub.s32 25, %s1059
          %p1061 = scmp.lt.s32.totalorder %s1060, 16
          %s1062 = scalar_select %p1061, %s1060, 16
          %s1063 = smul.u32 128, %s1062
          %p1064 = scmp.ne.s32.totalorder 0, %s1063
          %s1065 = smul.addr %s1059, 8
          %s1066 = scalar_lea.vmem %s4, %s1065
          // Predicated region
          $region41: #{tpu_custom_call.1} parent=39 // pred_check
            %p1067 = pneg %p1064
          $region42: #{tpu_custom_call.1} parent=39 // pred_check_branch
            %1069 = sbr.rel (%p1067) target = $region44
          $region43: #{tpu_custom_call.1} parent=39 // pred_region
            // Predicated region
            $region45: #{tpu_custom_call.1} parent=43 // pred_check
              _
            $region46: #{tpu_custom_call.1} parent=43 // pred_check_branch
              %1071 = sbr.rel (0) target = $region48
            $region47: #{tpu_custom_call.1} parent=43 // pred_region
              // Predicated region
              $region67: #{tpu_custom_call.1} parent=47 // pred_check
                _
              $region68: #{tpu_custom_call.1} parent=47 // pred_check_branch
                %1150 = sbr.rel (0) target = $region70
              $region69: #{tpu_custom_call.1} parent=47 // pred_region
                %s1151 = sshrl.u32 %s1062, 4
                // While loop
                $region71: #{tpu_custom_call.1} parent=69 // loop_pre_header
                  _
                $region72: #{tpu_custom_call.1} parent=69 // loop_header
                  %s1153 = sphi 0, %s1155
                  %p1154 = scmp.ge.s32.totalorder %s1153, %s1151
                  %s1158 = sphi 0, %s1195
                  %s1159 = sphi %s1055, %s1198
                  %s1160 = sphi %s1066, %s1199
                $region73: #{tpu_custom_call.1} parent=69 // loop_header_branch
                  %1157 = sbr.rel (%p1154) target = $region77
                $region74: #{tpu_custom_call.1} parent=69 // loop_body
                  %v1161 = vld [vmem:[%s1159] sm:$0xff]
                  %1162 = vst [vmem:[%s1160] sm:$0xff] %v1161
                  %v1163 = vld [vmem:[%s1159 + $0x8] sm:$0xff]
                  %1164 = vst [vmem:[%s1160 + $0x8] sm:$0xff] %v1163
                  %v1165 = vld [vmem:[%s1159 + $0x10] sm:$0xff]
                  %1166 = vst [vmem:[%s1160 + $0x10] sm:$0xff] %v1165
                  %v1167 = vld [vmem:[%s1159 + $0x18] sm:$0xff]
                  %1168 = vst [vmem:[%s1160 + $0x18] sm:$0xff] %v1167
                  %v1169 = vld [vmem:[%s1159 + $0x20] sm:$0xff]
                  %1170 = vst [vmem:[%s1160 + $0x20] sm:$0xff] %v1169
                  %v1171 = vld [vmem:[%s1159 + $0x28] sm:$0xff]
                  %1172 = vst [vmem:[%s1160 + $0x28] sm:$0xff] %v1171
                  %v1173 = vld [vmem:[%s1159 + $0x30] sm:$0xff]
                  %1174 = vst [vmem:[%s1160 + $0x30] sm:$0xff] %v1173
                  %v1175 = vld [vmem:[%s1159 + $0x38] sm:$0xff]
                  %1176 = vst [vmem:[%s1160 + $0x38] sm:$0xff] %v1175
                  %v1177 = vld [vmem:[%s1159 + $0x40] sm:$0xff]
                  %1178 = vst [vmem:[%s1160 + $0x40] sm:$0xff] %v1177
                  %v1179 = vld [vmem:[%s1159 + $0x48] sm:$0xff]
                  %1180 = vst [vmem:[%s1160 + $0x48] sm:$0xff] %v1179
                  %v1181 = vld [vmem:[%s1159 + $0x50] sm:$0xff]
                  %1182 = vst [vmem:[%s1160 + $0x50] sm:$0xff] %v1181
                  %v1183 = vld [vmem:[%s1159 + $0x58] sm:$0xff]
                  %1184 = vst [vmem:[%s1160 + $0x58] sm:$0xff] %v1183
                  %v1185 = vld [vmem:[%s1159 + $0x60] sm:$0xff]
                  %1186 = vst [vmem:[%s1160 + $0x60] sm:$0xff] %v1185
                  %v1187 = vld [vmem:[%s1159 + $0x68] sm:$0xff]
                  %1188 = vst [vmem:[%s1160 + $0x68] sm:$0xff] %v1187
                  %v1189 = vld [vmem:[%s1159 + $0x70] sm:$0xff]
                  %1190 = vst [vmem:[%s1160 + $0x70] sm:$0xff] %v1189
                  %v1191 = vld [vmem:[%s1159 + $0x78] sm:$0xff]
                  %1192 = vst [vmem:[%s1160 + $0x78] sm:$0xff] %v1191
                  %s1193 = sadd.s32 1, %s1158
                  %p1194 = scmp.ge.s32.totalorder %s1193, %s1151
                  %s1195 = scalar_select %p1194, 0, %s1193
                  %s1196 = smul.u32 %s1195, 128
                  %s1197 = smul.u32 %s1195, 128
                  %s1198 = scalar_lea.vmem %s1055, %s1196 [#allocation3]
                  %s1199 = scalar_lea.vmem %s1066, %s1197
                $region75: #{tpu_custom_call.1} parent=69 // loop_footer
                  %s1155 = sadd.s32 %s1153, 1
                $region76: #{tpu_custom_call.1} parent=69 // loop_footer_branch
                  %1152 = sbr.rel target = $region72
                $region77: #{tpu_custom_call.1} parent=69 // loop_exit
                  _
                %s1200 = sshrl.u32 %s1062, 4
                %s1201 = sand.u32 %s1062, 15
                %s1202 = smul.u32 %s1200, 16
                %s1203 = smul.u32 8, %s1202
                %s1204 = scalar_lea.vmem %s1055, %s1203 [#allocation3]
                %s1205 = smul.u32 8, %s1202
                %s1206 = scalar_lea.vmem %s1066, %s1205
                // While loop
                $region78: #{tpu_custom_call.1} parent=69 // loop_pre_header
                  _
                $region79: #{tpu_custom_call.1} parent=69 // loop_header
                  %s1208 = sphi 0, %s1210
                  %p1209 = scmp.ge.s32.totalorder %s1208, %s1201
                  %s1213 = sphi 0, %s1220
                  %s1214 = sphi %s1204, %s1223
                  %s1215 = sphi %s1206, %s1224
                $region80: #{tpu_custom_call.1} parent=69 // loop_header_branch
                  %1212 = sbr.rel (%p1209) target = $region84
                $region81: #{tpu_custom_call.1} parent=69 // loop_body
                  %v1216 = vld [vmem:[%s1214] sm:$0xff]
                  %1217 = vst [vmem:[%s1215] sm:$0xff] %v1216
                  %s1218 = sadd.s32 1, %s1213
                  %p1219 = scmp.ge.s32.totalorder %s1218, %s1201
                  %s1220 = scalar_select %p1219, 0, %s1218
                  %s1221 = smul.u32 %s1220, 8
                  %s1222 = smul.u32 %s1220, 8
                  %s1223 = scalar_lea.vmem %s1204, %s1221 [#allocation3]
                  %s1224 = scalar_lea.vmem %s1206, %s1222
                $region82: #{tpu_custom_call.1} parent=69 // loop_footer
                  %s1210 = sadd.s32 %s1208, 1
                $region83: #{tpu_custom_call.1} parent=69 // loop_footer_branch
                  %1207 = sbr.rel target = $region79
                $region84: #{tpu_custom_call.1} parent=69 // loop_exit
                  _
              $region70: #{tpu_custom_call.1} parent=47 // pred_fallthru
                _
              // Predicated region
              $region85: #{tpu_custom_call.1} parent=47 // pred_check
                _
              $region86: #{tpu_custom_call.1} parent=47 // pred_check_branch
                %1226 = sbr.rel target = $region88
              $region87: #{tpu_custom_call.1} parent=47 // pred_region
                _
              $region88: #{tpu_custom_call.1} parent=47 // pred_fallthru
                _
            $region48: #{tpu_custom_call.1} parent=43 // pred_fallthru
              _
            // Predicated region
            $region49: #{tpu_custom_call.1} parent=43 // pred_check
              _
            $region50: #{tpu_custom_call.1} parent=43 // pred_check_branch
              %1073 = sbr.rel target = $region52
            $region51: #{tpu_custom_call.1} parent=43 // pred_region
              %s1075 = sshrl.u32 %s1062, 4
              // While loop
              $region53: #{tpu_custom_call.1} parent=51 // loop_pre_header
                _
              $region54: #{tpu_custom_call.1} parent=51 // loop_header
                %s1077 = sphi 0, %s1079
                %p1078 = scmp.ge.s32.totalorder %s1077, %s1075
                %s1082 = sphi 0, %s1119
                %s1083 = sphi %s1055, %s1122
                %s1084 = sphi %s1066, %s1123
              $region55: #{tpu_custom_call.1} parent=51 // loop_header_branch
                %1081 = sbr.rel (%p1078) target = $region59
              $region56: #{tpu_custom_call.1} parent=51 // loop_body
                %v1085 = vld [vmem:[%s1083] sm:$0xff]
                %1086 = vst [vmem:[%s1084] sm:$0xff] %v1085
                %v1087 = vld [vmem:[%s1083 + $0x8] sm:$0xff]
                %1088 = vst [vmem:[%s1084 + $0x8] sm:$0xff] %v1087
                %v1089 = vld [vmem:[%s1083 + $0x10] sm:$0xff]
                %1090 = vst [vmem:[%s1084 + $0x10] sm:$0xff] %v1089
                %v1091 = vld [vmem:[%s1083 + $0x18] sm:$0xff]
                %1092 = vst [vmem:[%s1084 + $0x18] sm:$0xff] %v1091
                %v1093 = vld [vmem:[%s1083 + $0x20] sm:$0xff]
                %1094 = vst [vmem:[%s1084 + $0x20] sm:$0xff] %v1093
                %v1095 = vld [vmem:[%s1083 + $0x28] sm:$0xff]
                %1096 = vst [vmem:[%s1084 + $0x28] sm:$0xff] %v1095
                %v1097 = vld [vmem:[%s1083 + $0x30] sm:$0xff]
                %1098 = vst [vmem:[%s1084 + $0x30] sm:$0xff] %v1097
                %v1099 = vld [vmem:[%s1083 + $0x38] sm:$0xff]
                %1100 = vst [vmem:[%s1084 + $0x38] sm:$0xff] %v1099
                %v1101 = vld [vmem:[%s1083 + $0x40] sm:$0xff]
                %1102 = vst [vmem:[%s1084 + $0x40] sm:$0xff] %v1101
                %v1103 = vld [vmem:[%s1083 + $0x48] sm:$0xff]
                %1104 = vst [vmem:[%s1084 + $0x48] sm:$0xff] %v1103
                %v1105 = vld [vmem:[%s1083 + $0x50] sm:$0xff]
                %1106 = vst [vmem:[%s1084 + $0x50] sm:$0xff] %v1105
                %v1107 = vld [vmem:[%s1083 + $0x58] sm:$0xff]
                %1108 = vst [vmem:[%s1084 + $0x58] sm:$0xff] %v1107
                %v1109 = vld [vmem:[%s1083 + $0x60] sm:$0xff]
                %1110 = vst [vmem:[%s1084 + $0x60] sm:$0xff] %v1109
                %v1111 = vld [vmem:[%s1083 + $0x68] sm:$0xff]
                %1112 = vst [vmem:[%s1084 + $0x68] sm:$0xff] %v1111
                %v1113 = vld [vmem:[%s1083 + $0x70] sm:$0xff]
                %1114 = vst [vmem:[%s1084 + $0x70] sm:$0xff] %v1113
                %v1115 = vld [vmem:[%s1083 + $0x78] sm:$0xff]
                %1116 = vst [vmem:[%s1084 + $0x78] sm:$0xff] %v1115
                %s1117 = sadd.s32 1, %s1082
                %p1118 = scmp.ge.s32.totalorder %s1117, %s1075
                %s1119 = scalar_select %p1118, 0, %s1117
                %s1120 = smul.u32 %s1119, 128
                %s1121 = smul.u32 %s1119, 128
                %s1122 = scalar_lea.vmem %s1055, %s1120 [#allocation3]
                %s1123 = scalar_lea.vmem %s1066, %s1121
              $region57: #{tpu_custom_call.1} parent=51 // loop_footer
                %s1079 = sadd.s32 %s1077, 1
              $region58: #{tpu_custom_call.1} parent=51 // loop_footer_branch
                %1076 = sbr.rel target = $region54
              $region59: #{tpu_custom_call.1} parent=51 // loop_exit
                _
              %s1124 = sshrl.u32 %s1062, 4
              %s1125 = sand.u32 %s1062, 15
              %s1126 = smul.u32 %s1124, 16
              %s1127 = smul.u32 8, %s1126
              %s1128 = scalar_lea.vmem %s1055, %s1127 [#allocation3]
              %s1129 = smul.u32 8, %s1126
              %s1130 = scalar_lea.vmem %s1066, %s1129
              // While loop
              $region60: #{tpu_custom_call.1} parent=51 // loop_pre_header
                _
              $region61: #{tpu_custom_call.1} parent=51 // loop_header
                %s1132 = sphi 0, %s1134
                %p1133 = scmp.ge.s32.totalorder %s1132, %s1125
                %s1137 = sphi 0, %s1144
                %s1138 = sphi %s1128, %s1147
                %s1139 = sphi %s1130, %s1148
              $region62: #{tpu_custom_call.1} parent=51 // loop_header_branch
                %1136 = sbr.rel (%p1133) target = $region66
              $region63: #{tpu_custom_call.1} parent=51 // loop_body
                %v1140 = vld [vmem:[%s1138] sm:$0xff]
                %1141 = vst [vmem:[%s1139] sm:$0xff] %v1140
                %s1142 = sadd.s32 1, %s1137
                %p1143 = scmp.ge.s32.totalorder %s1142, %s1125
                %s1144 = scalar_select %p1143, 0, %s1142
                %s1145 = smul.u32 %s1144, 8
                %s1146 = smul.u32 %s1144, 8
                %s1147 = scalar_lea.vmem %s1128, %s1145 [#allocation3]
                %s1148 = scalar_lea.vmem %s1130, %s1146
              $region64: #{tpu_custom_call.1} parent=51 // loop_footer
                %s1134 = sadd.s32 %s1132, 1
              $region65: #{tpu_custom_call.1} parent=51 // loop_footer_branch
                %1131 = sbr.rel target = $region61
              $region66: #{tpu_custom_call.1} parent=51 // loop_exit
                _
            $region52: #{tpu_custom_call.1} parent=43 // pred_fallthru
              _
          $region44: #{tpu_custom_call.1} parent=39 // pred_fallthru
            _
          %1227 = vnop
        $region40: #{tpu_custom_call.1} parent=35 // pred_fallthru
          _
      $region36: #{tpu_custom_call.1} parent=5 // pred_fallthru
        _
      %p1228 = scmp.le.s32.totalorder 2, %s11
      // Predicated region
      $region89: #{tpu_custom_call.1} parent=5 // pred_check
        %p1229 = pneg %p1228
      $region90: #{tpu_custom_call.1} parent=5 // pred_check_branch
        %1231 = sbr.rel (%p1229) target = $region92
      $region91: #{tpu_custom_call.1} parent=5 // pred_region
        %s1232 = ssub.s32 %s11, 2
        // Predicated region
        $region93: #{tpu_custom_call.1} parent=91 // pred_check
          %p1233 = pneg %p134
        $region94: #{tpu_custom_call.1} parent=91 // pred_check_branch
          %1235 = sbr.rel (%p1233) target = $region96
        $region95: #{tpu_custom_call.1} parent=91 // pred_region
          %s1236 = sand.u32 %s119, 1
          %s1237 = sand.u32 %s119, 1
          %s1238 = smul.addr %s1237, 128
          %s1239 = scalar_lea.vmem [#allocation3], %s1238
        $region96: #{tpu_custom_call.1} parent=91 // pred_fallthru
          _
      $region92: #{tpu_custom_call.1} parent=5 // pred_fallthru
        _
    $region6: #{tpu_custom_call.1} parent=1 // loop_footer
      %s15 = sadd.s32 1, %s11
    $region7: #{tpu_custom_call.1} parent=1 // loop_footer_branch
      %10 = sbr.rel target = $region3
    $region8: #{tpu_custom_call.1} parent=1 // loop_exit
      _

</llo_original>
